<compile_context>
chip_gen: v5e
topology: v5e:2x2
jax: 0.10.0
libtpu: 0.0.40
codegen_flags: <defaults>
</compile_context>

<pallas_src>
import jax
import jax.numpy as jnp
from jax.experimental import pallas as pl
from jax.experimental.pallas import tpu as pltpu


def concat_squash_kernel(gate_ref, cbias_ref, x_ref, w_ref, o_ref):
    # x_ref: (TN, K) compute dtype; w_ref: (K, dim_out) compute dtype
    # gate_ref / cbias_ref: (1, dim_out) f32; o_ref: (TN, dim_out)
    h = jnp.dot(x_ref[...], w_ref[...], preferred_element_type=jnp.float32)
    o_ref[...] = (h * gate_ref[...] + cbias_ref[...]).astype(o_ref.dtype)


def _sublane_rows(*dtypes):
    """Minimum row granularity for dense sublane packing of the streamed tiles
    (f32: 8, bf16: 16, int8/fp8: 32)."""
    need = 8
    for dt in dtypes:
        isz = jnp.dtype(dt).itemsize
        need = max(need, {4: 8, 2: 16, 1: 32}.get(isz, 8))
    return need


def _choose_tile_n(N, B, dim_in, dim_out, x_itemsize, out_itemsize, sublane,
                   stream_budget_bytes=16 << 20, min_grid_steps=4):
    """Largest N-tile whose double-buffered x + out tiles fit the streaming
    VMEM budget: aligned to 256 rows when large (MXU pass / dense packing),
    to the sublane granularity when small, capped at 4096.  Shrunk if the
    total grid would have too few steps for v7x's two TensorCores."""
    per_row = 2 * (dim_in * x_itemsize + dim_out * out_itemsize)
    tn = max(sublane, min(4096, stream_budget_bytes // per_row))
    if tn >= 256:
        tn = (tn // 256) * 256
    else:
        tn = (tn // sublane) * sublane
    if N <= tn:
        tn = N
    # v7x megacore: keep >= min_grid_steps total steps so both TCs get work
    # and each pipeline gets primed; v5e/v6e (1 TC) are unaffected by this.
    while B * pl.cdiv(N, tn) < min_grid_steps and tn > sublane:
        tn = max(sublane, (tn // 2 // sublane) * sublane)
    return tn


def concat_squash_linear(ctx, x, params, *, compute_dtype=jnp.bfloat16,
                         out_dtype=None):
    """ctx: (B, 1, dim_ctx), x: (B, N, dim_in) -> (B, N, dim_out).

    compute_dtype: dtype x / W_layer are cast to for the streaming matmul
    (accumulation stays f32 via preferred_element_type; gate / combined bias
    and the per-element epilogue stay f32).  out_dtype defaults to x.dtype;
    pass jnp.bfloat16 if the consumer tolerates a bf16 output to also halve
    the write bytes.
    """
    B, N, dim_in = x.shape
    dim_out = params["w_layer"].shape[1]
    out_dtype = x.dtype if out_dtype is None else out_dtype

    # --- per-batch hyper network, hoisted out of the streaming kernel --------
    # (tiny: B x dim_ctx x dim_out; done in f32 for the sigmoid)
    ctx2 = ctx[:, 0, :].astype(jnp.float32)                        # (B, dim_ctx)
    gate = jax.nn.sigmoid(ctx2 @ params["w_gate"].astype(jnp.float32)
                          + params["b_gate"].astype(jnp.float32))   # (B, dim_out)
    cbias = gate * params["b_layer"].astype(jnp.float32) \
        + ctx2 @ params["w_bias"].astype(jnp.float32)               # (B, dim_out)
    gate = gate[:, None, :]                                         # (B, 1, dim_out) f32
    cbias = cbias[:, None, :]                                       # (B, 1, dim_out) f32

    # --- reduced-precision streaming operands (f32 accumulation in-kernel) ---
    x_c = x.astype(compute_dtype)
    w_c = params["w_layer"].astype(compute_dtype)

    # --- K hygiene: pad tiny dim_in to a multiple of 8 (zeros are inert) -----
    # TODO(synk): for very small dim_in (e.g. 3) a lane-dense repack (N->lanes)
    # or a VPU broadcast-multiply path would beat the padded MXU matmul.
    K = dim_in
    if K % 8 != 0:
        pad = (-K) % 8
        x_c = jnp.pad(x_c, ((0, 0), (0, 0), (0, pad)))
        w_c = jnp.pad(w_c, ((0, pad), (0, 0)))
        K += pad

    x_is = jnp.dtype(compute_dtype).itemsize
    out_is = jnp.dtype(out_dtype).itemsize
    sublane = _sublane_rows(compute_dtype, out_dtype)

    tn = _choose_tile_n(N, B, K, dim_out, x_is, out_is, sublane)
    grid = (B, pl.cdiv(N, tn))

    # --- generation-aware VMEM accounting -------------------------------------
    needed = (2 * tn * K * x_is            # double-buffered x tiles
              + 2 * tn * dim_out * out_is  # double-buffered out tiles
              + 1 * K * dim_out * x_is     # single-buffered resident W_layer
              + 4 * tn * dim_out           # f32 matmul intermediate
              + 2 * 2 * 8 * dim_out * 4)   # gate / cbias tiles (sublane-padded)
    try:
        # 128 MiB on v5e/v6e, 64 MiB per-TC on v7x.
        vmem_cap = pltpu.get_tpu_info().vmem_capacity_bytes
    except Exception:
        vmem_cap = 64 << 20  # conservative (v7x per-TC) if the query fails
    vmem_limit = int(min(0.6 * vmem_cap, max(2 * needed, 16 << 20)))
    vmem_limit = max(vmem_limit, int(1.25 * needed))

    flops = 2 * B * N * K * dim_out
    bytes_accessed = (B * N * (K * x_is + dim_out * out_is)
                      + K * dim_out * x_is + 4 * 2 * B * dim_out)

    gate_spec = pl.BlockSpec((pl.Squeezed(), 1, dim_out), lambda b, n: (b, 0, 0))
    cbias_spec = pl.BlockSpec((pl.Squeezed(), 1, dim_out), lambda b, n: (b, 0, 0))
    # x: streamed (TN, K) tiles.  Double-buffered by default; bump to
    # pipeline_mode=pl.Buffered(3) only if a trace shows exposed DMA latency.
    x_spec = pl.BlockSpec((pl.Squeezed(), tn, K), lambda b, n: (b, n, 0))
    out_spec = pl.BlockSpec((pl.Squeezed(), tn, dim_out), lambda b, n: (b, n, 0))

    def call(w_pipeline_mode):
        if w_pipeline_mode is None:
            w_spec = pl.BlockSpec((K, dim_out), lambda b, n: (0, 0))
        else:
            # W_layer: constant index_map -> resident in VMEM; single-buffer it
            # to halve its footprint (matters on v7x's 64 MiB per-TC VMEM).
            w_spec = pl.BlockSpec((K, dim_out), lambda b, n: (0, 0),
                                  pipeline_mode=w_pipeline_mode)
        return pl.pallas_call(
            concat_squash_kernel,
            out_shape=jax.ShapeDtypeStruct((B, N, dim_out), out_dtype),
            grid_spec=pltpu.PrefetchScalarGridSpec(
                num_scalar_prefetch=0,
                grid=grid,
                in_specs=[gate_spec, cbias_spec, x_spec, w_spec],
                out_specs=out_spec,
            ),
            compiler_params=pltpu.CompilerParams(
                dimension_semantics=("parallel", "parallel"),
                vmem_limit_bytes=vmem_limit),
            cost_estimate=pl.CostEstimate(flops=flops, transcendentals=0,
                                          bytes_accessed=bytes_accessed),
        )(gate, cbias, x_c, w_c)

    try:
        return call(pl.Buffered(1))
    except Exception:
        # Fallback for jax versions without pipeline_mode support: default
        # double-buffering of the resident weight (previously verified config).
        return call(None)


def init_params(key, dim_in, dim_out, dim_ctx, dtype=jnp.float32):
    """Deterministic init mimicking nn.Linear's uniform(-1/sqrt(fan_in), +)."""
    ks = jax.random.split(key, 5)

    def lin(k, fan_in, shape):
        bound = 1.0 / jnp.sqrt(fan_in)
        return jax.random.uniform(k, shape, dtype, -bound, bound)

    return {
        # stored as (in_features, out_features) == W^T of the PyTorch weight
        "w_layer": lin(ks[0], dim_in, (dim_in, dim_out)),
        "b_layer": lin(ks[1], dim_in, (dim_out,)),
        "w_gate":  lin(ks[2], dim_ctx, (dim_ctx, dim_out)),
        "b_gate":  lin(ks[3], dim_ctx, (dim_out,)),
        "w_bias":  lin(ks[4], dim_ctx, (dim_ctx, dim_out)),  # hyper_bias has no bias
    }


def reference(ctx, x, p, cast_dtype=None):
    """Plain-JAX ConcatSquashLinear.  If cast_dtype is given, x / W_layer are
    rounded through that dtype first (to compare against the reduced-precision
    streaming path on equal footing; accumulation stays f32)."""
    w = p["w_layer"]
    if cast_dtype is not None:
        x = x.astype(cast_dtype).astype(jnp.float32)
        w = w.astype(cast_dtype).astype(jnp.float32)
    gate = jax.nn.sigmoid(jnp.einsum("bic,co->bio", ctx, p["w_gate"]) + p["b_gate"])
    bias = jnp.einsum("bic,co->bio", ctx, p["w_bias"])
    h = jnp.einsum("bnd,do->bno", x, w) + p["b_layer"]
    return h * gate + bias


if __name__ == "__main__":
    B, N = 2, 64
    dim_in, dim_out, dim_ctx = 128, 128, 64   # lane-dense dim_out (multiple of 128)

    key = jax.random.PRNGKey(0)
    k_ctx, k_x, k_p = jax.random.split(key, 3)

    ctx = jax.random.normal(k_ctx, (B, 1, dim_ctx), jnp.float32)
    x = jax.random.normal(k_x, (B, N, dim_in), jnp.float32)
    params = init_params(k_p, dim_in, dim_out, dim_ctx)

    # f32 path: tight check against the plain-JAX reference.
    out_f32 = jax.block_until_ready(
        concat_squash_linear(ctx, x, params, compute_dtype=jnp.float32))
    ref_f32 = reference(ctx, x, params)
    assert out_f32.shape == (B, N, dim_out)
    assert jnp.allclose(out_f32, ref_f32, atol=1e-4, rtol=1e-4), \
        float(jnp.max(jnp.abs(out_f32 - ref_f32)))

    # Default bf16 streaming path: compare against a reference fed the same
    # bf16-rounded x / W_layer (both sides accumulate in f32, so only the
    # accumulation order / b_layer folding differ).
    out_bf16 = jax.block_until_ready(concat_squash_linear(ctx, x, params))
    ref_bf16 = reference(ctx, x, params, cast_dtype=jnp.bfloat16)
    assert out_bf16.shape == (B, N, dim_out)
    assert jnp.allclose(out_bf16, ref_bf16, atol=2e-3, rtol=2e-3), \
        float(jnp.max(jnp.abs(out_bf16 - ref_bf16)))

    print("KERNEL_OK")
</pallas_src>

<mosaic_0001>
module attributes {stable_mosaic.version = 11 : i64} {
  func.func @concat_squash_kernel(%arg0: i32, %arg1: i32, %arg2: memref<1x1x128xf32, #tpu.memory_space<vmem>>, %arg3: memref<1x1x128xf32, #tpu.memory_space<vmem>>, %arg4: memref<1x32x128xf32, #tpu.memory_space<vmem>>, %arg5: memref<128x128xf32, #tpu.memory_space<vmem>>, %arg6: memref<1x32x128xf32, #tpu.memory_space<vmem>>) attributes {dimension_semantics = [#tpu.dimension_semantics<parallel>, #tpu.dimension_semantics<parallel>], iteration_bounds = array<i64: 2, 2>, scalar_prefetch = 0 : i64, scratch_operands = 0 : i64, tpu.core_type = #tpu.core_type<tc>, window_params = [{transform_indices = @transform_0, window_bounds = array<i64: 1, 1, 128>}, {transform_indices = @transform_1, window_bounds = array<i64: 1, 1, 128>}, {transform_indices = @transform_2, window_bounds = array<i64: 1, 32, 128>}, {pipeline_mode = #tpu.pipeline_mode<synchronous>, transform_indices = @transform_3, window_bounds = array<i64: 128, 128>}, {transform_indices = @transform_4, window_bounds = array<i64: 1, 32, 128>}]} {
    %c0 = arith.constant 0 : index
    %c0_0 = arith.constant 0 : index
    %c0_1 = arith.constant 0 : index
    %0 = vector.load %arg4[%c0, %c0_0, %c0_1] : memref<1x32x128xf32, #tpu.memory_space<vmem>>, vector<1x32x128xf32>
    %1 = vector.shape_cast %0 : vector<1x32x128xf32> to vector<32x128xf32>
    %c0_2 = arith.constant 0 : index
    %c0_3 = arith.constant 0 : index
    %2 = vector.load %arg5[%c0_2, %c0_3] : memref<128x128xf32, #tpu.memory_space<vmem>>, vector<128x128xf32>
    %cst = arith.constant dense<0.000000e+00> : vector<32x128xf32>
    %3 = tpu.matmul %1, %2, %cst {dimension_numbers = #tpu.dot_dimension_numbers<[1], [0], [0], [1], [0, 0, 1, 1], [], []>} : vector<32x128xf32>, vector<128x128xf32>, vector<32x128xf32> -> vector<32x128xf32>
    %c0_4 = arith.constant 0 : index
    %c0_5 = arith.constant 0 : index
    %c0_6 = arith.constant 0 : index
    %4 = vector.load %arg2[%c0_4, %c0_5, %c0_6] : memref<1x1x128xf32, #tpu.memory_space<vmem>>, vector<1x1x128xf32>
    %5 = vector.shape_cast %4 : vector<1x1x128xf32> to vector<1x128xf32>
    %6 = vector.broadcast %5 : vector<1x128xf32> to vector<32x128xf32>
    %7 = arith.mulf %3, %6 : vector<32x128xf32>
    %c0_7 = arith.constant 0 : index
    %c0_8 = arith.constant 0 : index
    %c0_9 = arith.constant 0 : index
    %8 = vector.load %arg3[%c0_7, %c0_8, %c0_9] : memref<1x1x128xf32, #tpu.memory_space<vmem>>, vector<1x1x128xf32>
    %9 = vector.shape_cast %8 : vector<1x1x128xf32> to vector<1x128xf32>
    %10 = vector.broadcast %9 : vector<1x128xf32> to vector<32x128xf32>
    %11 = arith.addf %7, %10 : vector<32x128xf32>
    %c0_10 = arith.constant 0 : index
    %c0_11 = arith.constant 0 : index
    %c0_12 = arith.constant 0 : index
    %12 = vector.load %arg6[%c0_10, %c0_11, %c0_12] : memref<1x32x128xf32, #tpu.memory_space<vmem>>, vector<1x32x128xf32>
    %13 = vector.shape_cast %12 : vector<1x32x128xf32> to vector<32x128xf32>
    %14 = vector.shape_cast %11 : vector<32x128xf32> to vector<1x32x128xf32>
    tpu.vector_store %arg6[%c0_10, %c0_11, %c0_12], %14 {strides = array<i32>} : memref<1x32x128xf32, #tpu.memory_space<vmem>>, vector<1x32x128xf32>,
    return
  }
  func.func @transform_0(%arg0: i32, %arg1: i32) -> (i32, i32, i32) {
    %c0_i32 = arith.constant 0 : i32
    %c0_i32_0 = arith.constant 0 : i32
    %c0_i32_1 = arith.constant 0 : i32
    return %arg0, %c0_i32, %c0_i32_0 : i32, i32, i32
  }
  func.func @transform_1(%arg0: i32, %arg1: i32) -> (i32, i32, i32) {
    %c0_i32 = arith.constant 0 : i32
    %c0_i32_0 = arith.constant 0 : i32
    %c0_i32_1 = arith.constant 0 : i32
    return %arg0, %c0_i32, %c0_i32_0 : i32, i32, i32
  }
  func.func @transform_2(%arg0: i32, %arg1: i32) -> (i32, i32, i32) {
    %c0_i32 = arith.constant 0 : i32
    %c0_i32_0 = arith.constant 0 : i32
    return %arg0, %arg1, %c0_i32 : i32, i32, i32
  }
  func.func @transform_3(%arg0: i32, %arg1: i32) -> (i32, i32) {
    %c0_i32 = arith.constant 0 : i32
    %c0_i32_0 = arith.constant 0 : i32
    %c0_i32_1 = arith.constant 0 : i32
    return %c0_i32, %c0_i32_0 : i32, i32
  }
  func.func @transform_4(%arg0: i32, %arg1: i32) -> (i32, i32, i32) {
    %c0_i32 = arith.constant 0 : i32
    %c0_i32_0 = arith.constant 0 : i32
    return %arg0, %arg1, %c0_i32 : i32, i32, i32
  }
}

module attributes {stable_mosaic.version = 11 : i64} {
  func.func @concat_squash_kernel(%arg0: i32, %arg1: i32, %arg2: memref<1x1x128xf32, #tpu.memory_space<vmem>>, %arg3: memref<1x1x128xf32, #tpu.memory_space<vmem>>, %arg4: memref<1x32x128xf32, #tpu.memory_space<vmem>>, %arg5: memref<128x128xf32, #tpu.memory_space<vmem>>, %arg6: memref<1x32x128xf32, #tpu.memory_space<vmem>>) attributes {dimension_semantics = [#tpu.dimension_semantics<parallel>, #tpu.dimension_semantics<parallel>], iteration_bounds = array<i64: 2, 2>, scalar_prefetch = 0 : i64, scratch_operands = 0 : i64, tpu.core_type = #tpu.core_type<tc>, window_params = [{transform_indices = @transform_0, window_bounds = array<i64: 1, 1, 128>}, {transform_indices = @transform_1, window_bounds = array<i64: 1, 1, 128>}, {transform_indices = @transform_2, window_bounds = array<i64: 1, 32, 128>}, {pipeline_mode = #tpu.pipeline_mode<synchronous>, transform_indices = @transform_3, window_bounds = array<i64: 128, 128>}, {transform_indices = @transform_4, window_bounds = array<i64: 1, 32, 128>}]} {
    %c0 = arith.constant 0 : index
    %c0_0 = arith.constant 0 : index
    %c0_1 = arith.constant 0 : index
    %0 = vector.load %arg4[%c0, %c0_0, %c0_1] : memref<1x32x128xf32, #tpu.memory_space<vmem>>, vector<1x32x128xf32>
    %1 = vector.shape_cast %0 : vector<1x32x128xf32> to vector<32x128xf32>
    %c0_2 = arith.constant 0 : index
    %c0_3 = arith.constant 0 : index
    %2 = vector.load %arg5[%c0_2, %c0_3] : memref<128x128xf32, #tpu.memory_space<vmem>>, vector<128x128xf32>
    %cst = arith.constant dense<0.000000e+00> : vector<32x128xf32>
    %3 = tpu.matmul %1, %2, %cst {dimension_numbers = #tpu.dot_dimension_numbers<[1], [0], [0], [1], [0, 0, 1, 1], [], []>} : vector<32x128xf32>, vector<128x128xf32>, vector<32x128xf32> -> vector<32x128xf32>
    %c0_4 = arith.constant 0 : index
    %c0_5 = arith.constant 0 : index
    %c0_6 = arith.constant 0 : index
    %4 = vector.load %arg2[%c0_4, %c0_5, %c0_6] : memref<1x1x128xf32, #tpu.memory_space<vmem>>, vector<1x1x128xf32>
    %5 = vector.shape_cast %4 : vector<1x1x128xf32> to vector<1x128xf32>
    %6 = vector.broadcast %5 : vector<1x128xf32> to vector<32x128xf32>
    %7 = arith.mulf %3, %6 : vector<32x128xf32>
    %c0_7 = arith.constant 0 : index
    %c0_8 = arith.constant 0 : index
    %c0_9 = arith.constant 0 : index
    %8 = vector.load %arg3[%c0_7, %c0_8, %c0_9] : memref<1x1x128xf32, #tpu.memory_space<vmem>>, vector<1x1x128xf32>
    %9 = vector.shape_cast %8 : vector<1x1x128xf32> to vector<1x128xf32>
    %10 = vector.broadcast %9 : vector<1x128xf32> to vector<32x128xf32>
    %11 = arith.addf %7, %10 : vector<32x128xf32>
    %c0_10 = arith.constant 0 : index
    %c0_11 = arith.constant 0 : index
    %c0_12 = arith.constant 0 : index
    %12 = vector.load %arg6[%c0_10, %c0_11, %c0_12] : memref<1x32x128xf32, #tpu.memory_space<vmem>>, vector<1x32x128xf32>
    %13 = vector.shape_cast %12 : vector<1x32x128xf32> to vector<32x128xf32>
    %14 = vector.shape_cast %11 : vector<32x128xf32> to vector<1x32x128xf32>
    tpu.vector_store %arg6[%c0_10, %c0_11, %c0_12], %14 {strides = array<i32>} : memref<1x32x128xf32, #tpu.memory_space<vmem>>, vector<1x32x128xf32>,
    return
  }
  func.func @transform_0(%arg0: i32, %arg1: i32) -> (i32, i32, i32) {
    %c0_i32 = arith.constant 0 : i32
    %c0_i32_0 = arith.constant 0 : i32
    %c0_i32_1 = arith.constant 0 : i32
    return %arg0, %c0_i32, %c0_i32_0 : i32, i32, i32
  }
  func.func @transform_1(%arg0: i32, %arg1: i32) -> (i32, i32, i32) {
    %c0_i32 = arith.constant 0 : i32
    %c0_i32_0 = arith.constant 0 : i32
    %c0_i32_1 = arith.constant 0 : i32
    return %arg0, %c0_i32, %c0_i32_0 : i32, i32, i32
  }
  func.func @transform_2(%arg0: i32, %arg1: i32) -> (i32, i32, i32) {
    %c0_i32 = arith.constant 0 : i32
    %c0_i32_0 = arith.constant 0 : i32
    return %arg0, %arg1, %c0_i32 : i32, i32, i32
  }
  func.func @transform_3(%arg0: i32, %arg1: i32) -> (i32, i32) {
    %c0_i32 = arith.constant 0 : i32
    %c0_i32_0 = arith.constant 0 : i32
    %c0_i32_1 = arith.constant 0 : i32
    return %c0_i32, %c0_i32_0 : i32, i32
  }
  func.func @transform_4(%arg0: i32, %arg1: i32) -> (i32, i32, i32) {
    %c0_i32 = arith.constant 0 : i32
    %c0_i32_0 = arith.constant 0 : i32
    return %arg0, %arg1, %c0_i32 : i32, i32, i32
  }
}

</mosaic_0001>

<llo_original>
// kernel: tpu_custom_call.1
$region0: #{tpu_custom_call.1}
  #allocation0 [shape = 'u32[]', space=smem, size = 0x4, offset = 0x4, fixed_abs, tag = 'smem constant byte address 0x4 - core index']
  #allocation1 [shape = 'u32[72,128]{1,0:T(1,128)}', space=vmem, size = 0x9000, scoped, tag = 'internal scratch']
  %s0 = inlined_call_operand.hbm [shape: f32[2,1,128], index: 0, kind: input, shape index: {}]
  %s1 = inlined_call_operand.hbm [shape: f32[2,1,128], index: 1, kind: input, shape index: {}]
  %s2 = inlined_call_operand.hbm [shape: f32[2,64,128], index: 2, kind: input, shape index: {}]
  %s3 = inlined_call_operand.hbm [shape: f32[128,128], index: 3, kind: input, shape index: {}]
  %s4 = inlined_call_operand.hbm [shape: f32[2,64,128], index: 4, kind: output, shape index: {}]
  %s5 = sld [smem:[#allocation0]]
  $region65: #{tpu_custom_call.1} parent=0
    _
  %s7 = ssub.s32 1, %s5
  %s8 = scalar_select 0, %s7, %s5
  $region1: #{tpu_custom_call.1} parent=0
    #allocation2 [shape = 'u8[1024]{0}', space=vmem, size = 0x400, scoped, tag = 'input window, operand 0']
    #allocation3 [shape = 's32[2]{0}', space=sflag, size = 0x8, scoped, tag = 'scoped memory for tpu_custom_call.1']
    #allocation4 [shape = 's32[2]{0}', space=sflag, size = 0x8, scoped, tag = 'scoped memory for tpu_custom_call.1']
    #allocation5 [shape = 'u8[1024]{0}', space=vmem, size = 0x400, scoped, tag = 'input window, operand 1']
    #allocation6 [shape = 's32[2]{0}', space=sflag, size = 0x8, scoped, tag = 'scoped memory for tpu_custom_call.1']
    #allocation7 [shape = 'u8[32768]{0}', space=vmem, size = 0x8000, scoped, tag = 'input window, operand 2']
    #allocation8 [shape = 'u8[65536]{0}', space=vmem, size = 0x10000, scoped, tag = 'input window, operand 3, single buffered']
    #allocation9 [shape = 's32[1]{0}', space=sflag, size = 0x4, scoped, tag = 'scoped memory for tpu_custom_call.1']
    #allocation10 [shape = 'u8[32768]{0}', space=vmem, size = 0x8000, scoped, tag = 'output window, operand 0']
    %9 = vsyncpa [#allocation3], 0
    %s10 = scalar_lea.sflag [#allocation3], 1
    %11 = vsyncpa %s10, 0
    %12 = vsyncpa [#allocation6], 0
    %s13 = scalar_lea.sflag [#allocation6], 1
    %14 = vsyncpa %s13, 0
    %15 = vsyncpa [#allocation9], 0
    %16 = vsyncpa [#allocation4], 0
    %s17 = scalar_lea.sflag [#allocation4], 1
    %18 = vsyncpa %s17, 0
    loop: start=0, step=1, limit=6
    $region2: #{tpu_custom_call.1} parent=1 // loop_pre_header
      _
    $region3: #{tpu_custom_call.1} parent=1 // loop_header
      %s20 = sphi 0, %s24
      %p21 = scmp.ge.s32.totalorder %s20, 6
      %s27 = sphi 0, %s39
      %s28 = sphi 0, %s35
      %s29 = sphi 0, %s27
      %s30 = sphi 0, %s28
      %s31 = sphi 0, %s29
      %s32 = sphi 0, %s30
      %s42 = sphi 0, %s44
      %s45 = sphi 0, %s42
      %s46 = sphi 0, %s45
      %s62 = sphi 0, %s46
      %s68 = sphi 0, %s70
      %s71 = sphi 0, %s68
      %s72 = sphi 0, %s71
      %s88 = sphi 0, %s72
      %s96 = sphi 0, %s98
      %s99 = sphi 0, %s96
      %s100 = sphi 0, %s99
      %s116 = sphi 0, %s100
      %s120 = sphi 0, %s120
      %s122 = sphi 0, %s120
      %s123 = sphi 0, %s122
      %s137 = sphi 0, %s123
      %s145 = sphi 0, %s147
      %s148 = sphi 0, %s145
      %s149 = sphi 0, %s148
      %s165 = sphi 0, %s149
    $region4: #{tpu_custom_call.1} parent=1 // loop_header_branch
      %23 = sbr.rel (%p21) target = $region8
    $region5: #{tpu_custom_call.1} parent=1 // loop_body
      %s25 = ssub.s32 %s20, 1
      %s26 = ssub.s32 %s20, 2
      %s33 = sadd.s32 1, %s28
      %p34 = scmp.ge.s32.totalorder %s33, 2
      %s35 = scalar_select %p34, 0, %s33
      %s36 = sadd.s32 1, %s27
      %s37 = scalar_select %p34, %s36, %s27
      %p38 = scmp.ge.s32.totalorder %s37, 2
      %s39 = scalar_select %p38, 0, %s37
      %s40 = ssub.s32 %s27, %s39
      %p41 = scmp.eq.s32.totalorder %s40, 0
      %s43 = sadd.s32 %s42, 1
      %s44 = scalar_select %p41, %s42, %s43
      %p47 = pneg %p41
      %p48 = scmp.eq.s32.totalorder %s20, 3
      %p49 = por %p47, %p48
      %p50 = scmp.ne.s32.totalorder %s42, %s45
      %p51 = scmp.eq.s32.totalorder %s20, 0
      %p52 = por %p50, %p51
      %p53 = scmp.ne.s32.totalorder %s42, %s45
      %p54 = scmp.eq.s32.totalorder %s25, 3
      %p55 = por %p53, %p54
      %p56 = scmp.ne.s32.totalorder %s45, %s46
      %p57 = scmp.eq.s32.totalorder %s25, 0
      %p58 = por %p56, %p57
      %p59 = scmp.ne.s32.totalorder %s45, %s46
      %p60 = scmp.eq.s32.totalorder %s26, 3
      %p61 = por %p59, %p60
      %p63 = scmp.ne.s32.totalorder %s46, %s62
      %p64 = scmp.eq.s32.totalorder %s26, 0
      %p65 = por %p63, %p64
      %s66 = ssub.s32 %s27, %s39
      %p67 = scmp.eq.s32.totalorder %s66, 0
      %s69 = sadd.s32 %s68, 1
      %s70 = scalar_select %p67, %s68, %s69
      %p73 = pneg %p67
      %p74 = scmp.eq.s32.totalorder %s20, 3
      %p75 = por %p73, %p74
      %p76 = scmp.ne.s32.totalorder %s68, %s71
      %p77 = scmp.eq.s32.totalorder %s20, 0
      %p78 = por %p76, %p77
      %p79 = scmp.ne.s32.totalorder %s68, %s71
      %p80 = scmp.eq.s32.totalorder %s25, 3
      %p81 = por %p79, %p80
      %p82 = scmp.ne.s32.totalorder %s71, %s72
      %p83 = scmp.eq.s32.totalorder %s25, 0
      %p84 = por %p82, %p83
      %p85 = scmp.ne.s32.totalorder %s71, %s72
      %p86 = scmp.eq.s32.totalorder %s26, 3
      %p87 = por %p85, %p86
      %p89 = scmp.ne.s32.totalorder %s72, %s88
      %p90 = scmp.eq.s32.totalorder %s26, 0
      %p91 = por %p89, %p90
      %s92 = ssub.s32 %s27, %s39
      %s93 = ssub.s32 %s28, %s35
      %s94 = sor.u32 %s92, %s93
      %p95 = scmp.eq.s32.totalorder %s94, 0
      %s97 = sadd.s32 %s96, 1
      %s98 = scalar_select %p95, %s96, %s97
      %p101 = pneg %p95
      %p102 = scmp.eq.s32.totalorder %s20, 3
      %p103 = por %p101, %p102
      %p104 = scmp.ne.s32.totalorder %s96, %s99
      %p105 = scmp.eq.s32.totalorder %s20, 0
      %p106 = por %p104, %p105
      %p107 = scmp.ne.s32.totalorder %s96, %s99
      %p108 = scmp.eq.s32.totalorder %s25, 3
      %p109 = por %p107, %p108
      %p110 = scmp.ne.s32.totalorder %s99, %s100
      %p111 = scmp.eq.s32.totalorder %s25, 0
      %p112 = por %p110, %p111
      %p113 = scmp.ne.s32.totalorder %s99, %s100
      %p114 = scmp.eq.s32.totalorder %s26, 3
      %p115 = por %p113, %p114
      %p117 = scmp.ne.s32.totalorder %s100, %s116
      %p118 = scmp.eq.s32.totalorder %s26, 0
      %p119 = por %p117, %p118
      %s121 = sadd.s32 %s120, 1
      %p124 = scmp.eq.s32.totalorder %s20, 3
      %p125 = scmp.ne.s32.totalorder %s120, %s122
      %p126 = scmp.eq.s32.totalorder %s20, 0
      %p127 = por %p125, %p126
      %p128 = scmp.ne.s32.totalorder %s120, %s122
      %p129 = scmp.eq.s32.totalorder %s25, 3
      %p130 = por %p128, %p129
      %p131 = scmp.ne.s32.totalorder %s122, %s123
      %p132 = scmp.eq.s32.totalorder %s25, 0
      %p133 = por %p131, %p132
      %p134 = scmp.ne.s32.totalorder %s122, %s123
      %p135 = scmp.eq.s32.totalorder %s26, 3
      %p136 = por %p134, %p135
      %p138 = scmp.ne.s32.totalorder %s123, %s137
      %p139 = scmp.eq.s32.totalorder %s26, 0
      %p140 = por %p138, %p139
      %s141 = ssub.s32 %s27, %s39
      %s142 = ssub.s32 %s28, %s35
      %s143 = sor.u32 %s141, %s142
      %p144 = scmp.eq.s32.totalorder %s143, 0
      %s146 = sadd.s32 %s145, 1
      %s147 = scalar_select %p144, %s145, %s146
      %p150 = pneg %p144
      %p151 = scmp.eq.s32.totalorder %s20, 3
      %p152 = por %p150, %p151
      %p153 = scmp.ne.s32.totalorder %s145, %s148
      %p154 = scmp.eq.s32.totalorder %s20, 0
      %p155 = por %p153, %p154
      %p156 = scmp.ne.s32.totalorder %s145, %s148
      %p157 = scmp.eq.s32.totalorder %s25, 3
      %p158 = por %p156, %p157
      %p159 = scmp.ne.s32.totalorder %s148, %s149
      %p160 = scmp.eq.s32.totalorder %s25, 0
      %p161 = por %p159, %p160
      %p162 = scmp.ne.s32.totalorder %s148, %s149
      %p163 = scmp.eq.s32.totalorder %s26, 3
      %p164 = por %p162, %p163
      %p166 = scmp.ne.s32.totalorder %s149, %s165
      %p167 = scmp.eq.s32.totalorder %s26, 0
      %p168 = por %p166, %p167
      %p169 = scmp.le.s32.totalorder 1, %s20
      %p170 = scmp.lt.s32.totalorder %s20, 5
      %p171 = pnand %p169, %p170
      %p172 = pneg %p171
      // Predicated region
      $region9: #{tpu_custom_call.1} parent=5 // pred_check
        _
      $region10: #{tpu_custom_call.1} parent=5 // pred_check_branch
        %174 = sbr.rel (%p171) target = $region12
      $region11: #{tpu_custom_call.1} parent=5 // pred_region
        %s175 = ssub.s32 %s20, 1
        // Predicated region
        $region13: #{tpu_custom_call.1} parent=11 // pred_check
          %p176 = pneg %p133
        $region14: #{tpu_custom_call.1} parent=11 // pred_check_branch
          %178 = sbr.rel (%p176) target = $region16
        $region15: #{tpu_custom_call.1} parent=11 // pred_region
          %180 = vsyncadd [#allocation9], 0
          %s181 = sshll.u32 %s3, 4
          %s182 = int_to_ptr.hbm [resolvable:$true] %s181
          %s183 = sshll.u32 [#allocation8], 4
          %s184 = int_to_ptr.vmem [resolvable:$true] %s183
          %189 = dma.hbm_to_vmem [thread:$0]  %s182, 2048, %s184, [#allocation9], 128, 128, 8
        $region16: #{tpu_custom_call.1} parent=11 // pred_fallthru
          _
      $region12: #{tpu_custom_call.1} parent=5 // pred_fallthru
        _
      %p190 = scmp.lt.s32.totalorder %s20, 4
      // Predicated region
      $region17: #{tpu_custom_call.1} parent=5 // pred_check
        %p191 = pneg %p190
      $region18: #{tpu_custom_call.1} parent=5 // pred_check_branch
        %193 = sbr.rel (%p191) target = $region20
      $region19: #{tpu_custom_call.1} parent=5 // pred_region
        // Predicated region
        $region21: #{tpu_custom_call.1} parent=19 // pred_check
          %p194 = pneg %p52
        $region22: #{tpu_custom_call.1} parent=19 // pred_check_branch
          %196 = sbr.rel (%p194) target = $region24
        $region23: #{tpu_custom_call.1} parent=19 // pred_region
          %s197 = sand.u32 %s42, 1
          %s198 = scalar_lea.sflag [#allocation3], %s197
          %s199 = sand.u32 %s42, 1
          %s200 = scalar_lea.vmem [#allocation2], %s199
          %202 = vsyncadd %s198, 0
          %s203 = scalar_lea.hbm %s0, %s27
          %s205 = sshll.u32 %s203, 4
          %s206 = int_to_ptr.hbm [resolvable:$true] %s205
          %s207 = sshll.u32 %s200, 4
          %s208 = int_to_ptr.vmem [resolvable:$true] %s207
          %210 = dma.hbm_to_vmem [thread:$0]  %s206, 16, %s208, %s198
        $region24: #{tpu_custom_call.1} parent=19 // pred_fallthru
          _
        // Predicated region
        $region25: #{tpu_custom_call.1} parent=19 // pred_check
          %p211 = pneg %p78
        $region26: #{tpu_custom_call.1} parent=19 // pred_check_branch
          %213 = sbr.rel (%p211) target = $region28
        $region27: #{tpu_custom_call.1} parent=19 // pred_region
          %s214 = sand.u32 %s20, 1
          %s215 = scalar_lea.sflag [#allocation6], %s214
          %s216 = sand.u32 %s68, 1
          %s217 = scalar_lea.vmem [#allocation5], %s216
          %219 = vsyncadd %s215, 0
          %s220 = scalar_lea.hbm %s1, %s27
          %s222 = sshll.u32 %s220, 4
          %s223 = int_to_ptr.hbm [resolvable:$true] %s222
          %s224 = sshll.u32 %s217, 4
          %s225 = int_to_ptr.vmem [resolvable:$true] %s224
          %227 = dma.hbm_to_vmem [thread:$0]  %s223, 16, %s225, %s215
        $region28: #{tpu_custom_call.1} parent=19 // pred_fallthru
          _
        // Predicated region
        $region29: #{tpu_custom_call.1} parent=19 // pred_check
          %p228 = pneg %p106
        $region30: #{tpu_custom_call.1} parent=19 // pred_check_branch
          %230 = sbr.rel (%p228) target = $region32
        $region31: #{tpu_custom_call.1} parent=19 // pred_region
          %s231 = sand.u32 %s20, 1
          %s232 = scalar_lea.sflag [#allocation6], %s231
          %s233 = sand.u32 %s96, 1
          %s234 = smul.addr %s233, 32
          %s235 = scalar_lea.vmem [#allocation7], %s234
          %s236 = smul.u32 4, %s28
          %238 = vsyncadd %s232, 0
          %s239 = smul.addr %s27, 8
          %s240 = sadd.s32 %s236, %s239
          %s241 = smul.addr %s240, 8
          %s242 = scalar_lea.hbm %s2, %s241
          %s243 = sshll.u32 %s242, 4
          %s244 = int_to_ptr.hbm [resolvable:$true] %s243
          %s245 = sshll.u32 %s235, 4
          %s246 = int_to_ptr.vmem [resolvable:$true] %s245
          %251 = dma.hbm_to_vmem [thread:$0]  %s244, 512, %s246, %s232, 128, 128, 8
        $region32: #{tpu_custom_call.1} parent=19 // pred_fallthru
          _
      $region20: #{tpu_custom_call.1} parent=5 // pred_fallthru
        _
      %p252 = scmp.le.s32.totalorder 1, %s20
      %p253 = scmp.lt.s32.totalorder %s20, 5
      %p254 = pnand %p252, %p253
      %p255 = pneg %p254
      // Predicated region
      $region33: #{tpu_custom_call.1} parent=5 // pred_check
        _
      $region34: #{tpu_custom_call.1} parent=5 // pred_check_branch
        %257 = sbr.rel (%p254) target = $region36
      $region35: #{tpu_custom_call.1} parent=5 // pred_region
        %s258 = ssub.s32 %s20, 1
        %s259 = sand.u32 %s45, 1
        %s260 = scalar_lea.sflag [#allocation3], %s259
        %s261 = sand.u32 %s45, 1
        %s262 = scalar_lea.vmem [#allocation2], %s261
        // Predicated region
        $region37: #{tpu_custom_call.1} parent=35 // pred_check
          %p263 = pneg %p58
        $region38: #{tpu_custom_call.1} parent=35 // pred_check_branch
          %265 = sbr.rel (%p263) target = $region40
        $region39: #{tpu_custom_call.1} parent=35 // pred_region
          %267 = dma.done %s260, 16
        $region40: #{tpu_custom_call.1} parent=35 // pred_fallthru
          _
        %s268 = sand.u32 %s25, 1
        %s269 = scalar_lea.sflag [#allocation6], %s268
        %s270 = sand.u32 %s71, 1
        %s271 = scalar_lea.vmem [#allocation5], %s270
        // Predicated region
        $region41: #{tpu_custom_call.1} parent=35 // pred_check
          %p272 = pneg %p84
        $region42: #{tpu_custom_call.1} parent=35 // pred_check_branch
          %274 = sbr.rel (%p272) target = $region44
        $region43: #{tpu_custom_call.1} parent=35 // pred_region
          %276 = dma.done %s269, 16
        $region44: #{tpu_custom_call.1} parent=35 // pred_fallthru
          _
        %s277 = sand.u32 %s25, 1
        %s278 = scalar_lea.sflag [#allocation6], %s277
        %s279 = sand.u32 %s99, 1
        %s280 = smul.addr %s279, 32
        %s281 = scalar_lea.vmem [#allocation7], %s280
        // Predicated region
        $region45: #{tpu_custom_call.1} parent=35 // pred_check
          %p282 = pneg %p112
        $region46: #{tpu_custom_call.1} parent=35 // pred_check_branch
          %284 = sbr.rel (%p282) target = $region48
        $region47: #{tpu_custom_call.1} parent=35 // pred_region
          %286 = dma.done %s278, 512
        $region48: #{tpu_custom_call.1} parent=35 // pred_fallthru
          _
        // Predicated region
        $region49: #{tpu_custom_call.1} parent=35 // pred_check
          %p287 = pneg %p133
        $region50: #{tpu_custom_call.1} parent=35 // pred_check_branch
          %289 = sbr.rel (%p287) target = $region52
        $region51: #{tpu_custom_call.1} parent=35 // pred_region
          %291 = dma.done [#allocation9], 2048
        $region52: #{tpu_custom_call.1} parent=35 // pred_fallthru
          _
        %s292 = sand.u32 %s45, 1
        %s293 = scalar_lea.sflag [#allocation3], %s292
        %s294 = sand.u32 %s45, 1
        %s295 = scalar_lea.vmem [#allocation2], %s294
        %p296 = pneg %p58
        %p297 = pneg %p55
        %s298 = sand.u32 %s25, 1
        %s299 = scalar_lea.sflag [#allocation6], %s298
        %s300 = sand.u32 %s71, 1
        %s301 = scalar_lea.vmem [#allocation5], %s300
        %p302 = pneg %p84
        %p303 = pneg %p81
        %s304 = sand.u32 %s25, 1
        %s305 = scalar_lea.sflag [#allocation6], %s304
        %s306 = sand.u32 %s99, 1
        %s307 = smul.addr %s306, 32
        %s308 = scalar_lea.vmem [#allocation7], %s307
        %p309 = pneg %p112
        %p310 = pneg %p109
        %p311 = pneg %p133
        %p312 = pneg %p130
        %p313 = pneg %p161
        %p314 = pneg %p158
        %s315 = sand.u32 %s148, 1
        %s316 = scalar_lea.sflag [#allocation4], %s315
        %s317 = sand.u32 %s148, 1
        %s318 = smul.addr %s317, 32
        %s319 = scalar_lea.vmem [#allocation10], %s318
        %s320 = smul.u32 4, %s30
        %s321 = smul.u32 4, %s30
        %v322 = vld [vmem:[%s281] sm:$0xff]
        %v323 = vld [vmem:[%s281 + $0x8] sm:$0xff]
        %v324 = vld [vmem:[%s281 + $0x10] sm:$0xff]
        %v325 = vld [vmem:[%s281 + $0x18] sm:$0xff]
        %v326 = vld [vmem:[#allocation8] sm:$0xff]
        %v327 = vld [vmem:[#allocation8 + $0x8] sm:$0xff]
        %v328 = vld [vmem:[#allocation8 + $0x10] sm:$0xff]
        %v329 = vld [vmem:[#allocation8 + $0x18] sm:$0xff]
        %v330 = vld [vmem:[#allocation8 + $0x20] sm:$0xff]
        %v331 = vld [vmem:[#allocation8 + $0x28] sm:$0xff]
        %v332 = vld [vmem:[#allocation8 + $0x30] sm:$0xff]
        %v333 = vld [vmem:[#allocation8 + $0x38] sm:$0xff]
        %v334 = vld [vmem:[#allocation8 + $0x40] sm:$0xff]
        %v335 = vld [vmem:[#allocation8 + $0x48] sm:$0xff]
        %v336 = vld [vmem:[#allocation8 + $0x50] sm:$0xff]
        %v337 = vld [vmem:[#allocation8 + $0x58] sm:$0xff]
        %v338 = vld [vmem:[#allocation8 + $0x60] sm:$0xff]
        %v339 = vld [vmem:[#allocation8 + $0x68] sm:$0xff]
        %v340 = vld [vmem:[#allocation8 + $0x70] sm:$0xff]
        %v341 = vld [vmem:[#allocation8 + $0x78] sm:$0xff]
        %342 = vmatpush.msra.mxu0 %v341
        %343 = vmatpush.msra.mxu0 %v340
        %344 = vmatpush.msra.mxu0 %v339
        %345 = vmatpush.msra.mxu0 %v338
        %346 = vmatpush.msra.mxu0 %v337
        %347 = vmatpush.msra.mxu0 %v336
        %348 = vmatpush.msra.mxu0 %v335
        %349 = vmatpush.msra.mxu0 %v334
        %350 = vmatpush.msra.mxu0 %v333
        %351 = vmatpush.msra.mxu0 %v332
        %352 = vmatpush.msra.mxu0 %v331
        %353 = vmatpush.msra.mxu0 %v330
        %354 = vmatpush.msra.mxu0 %v329
        %355 = vmatpush.msra.mxu0 %v328
        %356 = vmatpush.msra.mxu0 %v327
        %357 = vmatpush.msra.mxu0 %v326
        %358 = vmatmul.f32.gmra.mxu0 %v322
        %v359 = vpop.f32.mrf.mxu0
        %v360 = vadd.f32 0.0, %v359
        %361 = vmatmul.f32.gmra.mxu0 %v323
        %v362 = vpop.f32.mrf.mxu0
        %v363 = vadd.f32 0.0, %v362
        %364 = vmatmul.f32.gmra.mxu0 %v324
        %v365 = vpop.f32.mrf.mxu0
        %v366 = vadd.f32 0.0, %v365
        %367 = vmatmul.f32.gmra.mxu0 %v325
        %v368 = vpop.f32.mrf.mxu0
        %v369 = vadd.f32 0.0, %v368
        %370 = vdwg.mxu0
        %v371 = vld [vmem:[%s262] sm:$0x1]
        %v373 = vperm.slane %v371, 0
        %v375 = vmul.f32 %v360, %v373
        %v376 = vmul.f32 %v363, %v373
        %v377 = vmul.f32 %v366, %v373
        %v378 = vmul.f32 %v369, %v373
        %v379 = vld [vmem:[%s271] sm:$0x1]
        %v381 = vperm.slane %v379, 0
        %v383 = vadd.f32 %v375, %v381
        %v384 = vadd.f32 %v376, %v381
        %v385 = vadd.f32 %v377, %v381
        %v386 = vadd.f32 %v378, %v381
        %387 = vst [vmem:[%s319] sm:$0xff] %v383
        %388 = vst [vmem:[%s319 + $0x8] sm:$0xff] %v384
        %389 = vst [vmem:[%s319 + $0x10] sm:$0xff] %v385
        %390 = vst [vmem:[%s319 + $0x18] sm:$0xff] %v386
        %s391 = sand.u32 %s148, 1
        %s392 = scalar_lea.sflag [#allocation4], %s391
        %s393 = sand.u32 %s148, 1
        %s394 = smul.addr %s393, 32
        %s395 = scalar_lea.vmem [#allocation10], %s394
        // Predicated region
        $region53: #{tpu_custom_call.1} parent=35 // pred_check
          %p396 = pneg %p158
        $region54: #{tpu_custom_call.1} parent=35 // pred_check_branch
          %398 = sbr.rel (%p396) target = $region56
        $region55: #{tpu_custom_call.1} parent=35 // pred_region
          %s399 = smul.u32 4, %s30
          %401 = vsyncadd %s392, 0
          %s402 = smul.addr %s29, 8
          %s403 = sadd.s32 %s399, %s402
          %s404 = smul.addr %s403, 8
          %s405 = scalar_lea.hbm %s4, %s404
          %s406 = sshll.u32 %s395, 4
          %s407 = int_to_ptr.vmem [resolvable:$true] %s406
          %s408 = sshll.u32 %s405, 4
          %s409 = int_to_ptr.hbm [resolvable:$true] %s408
          %414 = dma.vmem_to_hbm [thread:$0]  %s407, 512, %s409, %s392, 128, 128, 8
        $region56: #{tpu_custom_call.1} parent=35 // pred_fallthru
          _
      $region36: #{tpu_custom_call.1} parent=5 // pred_fallthru
        _
      %p415 = scmp.le.s32.totalorder 2, %s20
      // Predicated region
      $region57: #{tpu_custom_call.1} parent=5 // pred_check
        %p416 = pneg %p415
      $region58: #{tpu_custom_call.1} parent=5 // pred_check_branch
        %418 = sbr.rel (%p416) target = $region60
      $region59: #{tpu_custom_call.1} parent=5 // pred_region
        %s419 = ssub.s32 %s20, 2
        // Predicated region
        $region61: #{tpu_custom_call.1} parent=59 // pred_check
          %p420 = pneg %p164
        $region62: #{tpu_custom_call.1} parent=59 // pred_check_branch
          %422 = sbr.rel (%p420) target = $region64
        $region63: #{tpu_custom_call.1} parent=59 // pred_region
          %s423 = sand.u32 %s149, 1
          %s424 = scalar_lea.sflag [#allocation4], %s423
          %s425 = sand.u32 %s149, 1
          %s426 = smul.addr %s425, 32
          %s427 = scalar_lea.vmem [#allocation10], %s426
          %429 = dma.done %s424, 512
        $region64: #{tpu_custom_call.1} parent=59 // pred_fallthru
          _
      $region60: #{tpu_custom_call.1} parent=5 // pred_fallthru
        _
    $region6: #{tpu_custom_call.1} parent=1 // loop_footer
      %s24 = sadd.s32 1, %s20
    $region7: #{tpu_custom_call.1} parent=1 // loop_footer_branch
      %19 = sbr.rel target = $region3
    $region8: #{tpu_custom_call.1} parent=1 // loop_exit
      _
    %430 = vsyncpa [#allocation3], 1
    %s431 = scalar_lea.sflag [#allocation3], 1
    %432 = vsyncpa %s431, 1
    %433 = vsyncpa [#allocation6], 1
    %s434 = scalar_lea.sflag [#allocation6], 1
    %435 = vsyncpa %s434, 1
    %436 = vsyncpa [#allocation9], 1
    %437 = vsyncpa [#allocation4], 1
    %s438 = scalar_lea.sflag [#allocation4], 1
    %439 = vsyncpa %s438, 1

// kernel: tpu_custom_call.1
$region0: #{tpu_custom_call.1}
  #allocation0 [shape = 'u32[]', space=smem, size = 0x4, offset = 0x4, fixed_abs, tag = 'smem constant byte address 0x4 - core index']
  #allocation1 [shape = 'u32[72,128]{1,0:T(1,128)}', space=vmem, size = 0x9000, scoped, tag = 'internal scratch']
  %s0 = inlined_call_operand.hbm [shape: f32[2,1,128], index: 0, kind: input, shape index: {}]
  %s1 = inlined_call_operand.hbm [shape: f32[2,1,128], index: 1, kind: input, shape index: {}]
  %s2 = inlined_call_operand.hbm [shape: f32[2,64,128], index: 2, kind: input, shape index: {}]
  %s3 = inlined_call_operand.hbm [shape: f32[128,128], index: 3, kind: input, shape index: {}]
  %s4 = inlined_call_operand.hbm [shape: f32[2,64,128], index: 4, kind: output, shape index: {}]
  %s5 = sld [smem:[#allocation0]]
  $region65: #{tpu_custom_call.1} parent=0
    _
  %s7 = ssub.s32 1, %s5
  %s8 = scalar_select 0, %s7, %s5
  $region1: #{tpu_custom_call.1} parent=0
    #allocation2 [shape = 'u8[1024]{0}', space=vmem, size = 0x400, scoped, tag = 'input window, operand 0']
    #allocation3 [shape = 's32[2]{0}', space=sflag, size = 0x8, scoped, tag = 'scoped memory for tpu_custom_call.1']
    #allocation4 [shape = 's32[2]{0}', space=sflag, size = 0x8, scoped, tag = 'scoped memory for tpu_custom_call.1']
    #allocation5 [shape = 'u8[1024]{0}', space=vmem, size = 0x400, scoped, tag = 'input window, operand 1']
    #allocation6 [shape = 's32[2]{0}', space=sflag, size = 0x8, scoped, tag = 'scoped memory for tpu_custom_call.1']
    #allocation7 [shape = 'u8[32768]{0}', space=vmem, size = 0x8000, scoped, tag = 'input window, operand 2']
    #allocation8 [shape = 'u8[65536]{0}', space=vmem, size = 0x10000, scoped, tag = 'input window, operand 3, single buffered']
    #allocation9 [shape = 's32[1]{0}', space=sflag, size = 0x4, scoped, tag = 'scoped memory for tpu_custom_call.1']
    #allocation10 [shape = 'u8[32768]{0}', space=vmem, size = 0x8000, scoped, tag = 'output window, operand 0']
    %9 = vsyncpa [#allocation3], 0
    %s10 = scalar_lea.sflag [#allocation3], 1
    %11 = vsyncpa %s10, 0
    %12 = vsyncpa [#allocation6], 0
    %s13 = scalar_lea.sflag [#allocation6], 1
    %14 = vsyncpa %s13, 0
    %15 = vsyncpa [#allocation9], 0
    %16 = vsyncpa [#allocation4], 0
    %s17 = scalar_lea.sflag [#allocation4], 1
    %18 = vsyncpa %s17, 0
    loop: start=0, step=1, limit=6
    $region2: #{tpu_custom_call.1} parent=1 // loop_pre_header
      _
    $region3: #{tpu_custom_call.1} parent=1 // loop_header
      %s20 = sphi 0, %s24
      %p21 = scmp.ge.s32.totalorder %s20, 6
      %s27 = sphi 0, %s39
      %s28 = sphi 0, %s35
      %s29 = sphi 0, %s27
      %s30 = sphi 0, %s28
      %s31 = sphi 0, %s29
      %s32 = sphi 0, %s30
      %s42 = sphi 0, %s44
      %s45 = sphi 0, %s42
      %s46 = sphi 0, %s45
      %s62 = sphi 0, %s46
      %s68 = sphi 0, %s70
      %s71 = sphi 0, %s68
      %s72 = sphi 0, %s71
      %s88 = sphi 0, %s72
      %s96 = sphi 0, %s98
      %s99 = sphi 0, %s96
      %s100 = sphi 0, %s99
      %s116 = sphi 0, %s100
      %s120 = sphi 0, %s120
      %s122 = sphi 0, %s120
      %s123 = sphi 0, %s122
      %s137 = sphi 0, %s123
      %s145 = sphi 0, %s147
      %s148 = sphi 0, %s145
      %s149 = sphi 0, %s148
      %s165 = sphi 0, %s149
    $region4: #{tpu_custom_call.1} parent=1 // loop_header_branch
      %23 = sbr.rel (%p21) target = $region8
    $region5: #{tpu_custom_call.1} parent=1 // loop_body
      %s25 = ssub.s32 %s20, 1
      %s26 = ssub.s32 %s20, 2
      %s33 = sadd.s32 1, %s28
      %p34 = scmp.ge.s32.totalorder %s33, 2
      %s35 = scalar_select %p34, 0, %s33
      %s36 = sadd.s32 1, %s27
      %s37 = scalar_select %p34, %s36, %s27
      %p38 = scmp.ge.s32.totalorder %s37, 2
      %s39 = scalar_select %p38, 0, %s37
      %s40 = ssub.s32 %s27, %s39
      %p41 = scmp.eq.s32.totalorder %s40, 0
      %s43 = sadd.s32 %s42, 1
      %s44 = scalar_select %p41, %s42, %s43
      %p47 = pneg %p41
      %p48 = scmp.eq.s32.totalorder %s20, 3
      %p49 = por %p47, %p48
      %p50 = scmp.ne.s32.totalorder %s42, %s45
      %p51 = scmp.eq.s32.totalorder %s20, 0
      %p52 = por %p50, %p51
      %p53 = scmp.ne.s32.totalorder %s42, %s45
      %p54 = scmp.eq.s32.totalorder %s25, 3
      %p55 = por %p53, %p54
      %p56 = scmp.ne.s32.totalorder %s45, %s46
      %p57 = scmp.eq.s32.totalorder %s25, 0
      %p58 = por %p56, %p57
      %p59 = scmp.ne.s32.totalorder %s45, %s46
      %p60 = scmp.eq.s32.totalorder %s26, 3
      %p61 = por %p59, %p60
      %p63 = scmp.ne.s32.totalorder %s46, %s62
      %p64 = scmp.eq.s32.totalorder %s26, 0
      %p65 = por %p63, %p64
      %s66 = ssub.s32 %s27, %s39
      %p67 = scmp.eq.s32.totalorder %s66, 0
      %s69 = sadd.s32 %s68, 1
      %s70 = scalar_select %p67, %s68, %s69
      %p73 = pneg %p67
      %p74 = scmp.eq.s32.totalorder %s20, 3
      %p75 = por %p73, %p74
      %p76 = scmp.ne.s32.totalorder %s68, %s71
      %p77 = scmp.eq.s32.totalorder %s20, 0
      %p78 = por %p76, %p77
      %p79 = scmp.ne.s32.totalorder %s68, %s71
      %p80 = scmp.eq.s32.totalorder %s25, 3
      %p81 = por %p79, %p80
      %p82 = scmp.ne.s32.totalorder %s71, %s72
      %p83 = scmp.eq.s32.totalorder %s25, 0
      %p84 = por %p82, %p83
      %p85 = scmp.ne.s32.totalorder %s71, %s72
      %p86 = scmp.eq.s32.totalorder %s26, 3
      %p87 = por %p85, %p86
      %p89 = scmp.ne.s32.totalorder %s72, %s88
      %p90 = scmp.eq.s32.totalorder %s26, 0
      %p91 = por %p89, %p90
      %s92 = ssub.s32 %s27, %s39
      %s93 = ssub.s32 %s28, %s35
      %s94 = sor.u32 %s92, %s93
      %p95 = scmp.eq.s32.totalorder %s94, 0
      %s97 = sadd.s32 %s96, 1
      %s98 = scalar_select %p95, %s96, %s97
      %p101 = pneg %p95
      %p102 = scmp.eq.s32.totalorder %s20, 3
      %p103 = por %p101, %p102
      %p104 = scmp.ne.s32.totalorder %s96, %s99
      %p105 = scmp.eq.s32.totalorder %s20, 0
      %p106 = por %p104, %p105
      %p107 = scmp.ne.s32.totalorder %s96, %s99
      %p108 = scmp.eq.s32.totalorder %s25, 3
      %p109 = por %p107, %p108
      %p110 = scmp.ne.s32.totalorder %s99, %s100
      %p111 = scmp.eq.s32.totalorder %s25, 0
      %p112 = por %p110, %p111
      %p113 = scmp.ne.s32.totalorder %s99, %s100
      %p114 = scmp.eq.s32.totalorder %s26, 3
      %p115 = por %p113, %p114
      %p117 = scmp.ne.s32.totalorder %s100, %s116
      %p118 = scmp.eq.s32.totalorder %s26, 0
      %p119 = por %p117, %p118
      %s121 = sadd.s32 %s120, 1
      %p124 = scmp.eq.s32.totalorder %s20, 3
      %p125 = scmp.ne.s32.totalorder %s120, %s122
      %p126 = scmp.eq.s32.totalorder %s20, 0
      %p127 = por %p125, %p126
      %p128 = scmp.ne.s32.totalorder %s120, %s122
      %p129 = scmp.eq.s32.totalorder %s25, 3
      %p130 = por %p128, %p129
      %p131 = scmp.ne.s32.totalorder %s122, %s123
      %p132 = scmp.eq.s32.totalorder %s25, 0
      %p133 = por %p131, %p132
      %p134 = scmp.ne.s32.totalorder %s122, %s123
      %p135 = scmp.eq.s32.totalorder %s26, 3
      %p136 = por %p134, %p135
      %p138 = scmp.ne.s32.totalorder %s123, %s137
      %p139 = scmp.eq.s32.totalorder %s26, 0
      %p140 = por %p138, %p139
      %s141 = ssub.s32 %s27, %s39
      %s142 = ssub.s32 %s28, %s35
      %s143 = sor.u32 %s141, %s142
      %p144 = scmp.eq.s32.totalorder %s143, 0
      %s146 = sadd.s32 %s145, 1
      %s147 = scalar_select %p144, %s145, %s146
      %p150 = pneg %p144
      %p151 = scmp.eq.s32.totalorder %s20, 3
      %p152 = por %p150, %p151
      %p153 = scmp.ne.s32.totalorder %s145, %s148
      %p154 = scmp.eq.s32.totalorder %s20, 0
      %p155 = por %p153, %p154
      %p156 = scmp.ne.s32.totalorder %s145, %s148
      %p157 = scmp.eq.s32.totalorder %s25, 3
      %p158 = por %p156, %p157
      %p159 = scmp.ne.s32.totalorder %s148, %s149
      %p160 = scmp.eq.s32.totalorder %s25, 0
      %p161 = por %p159, %p160
      %p162 = scmp.ne.s32.totalorder %s148, %s149
      %p163 = scmp.eq.s32.totalorder %s26, 3
      %p164 = por %p162, %p163
      %p166 = scmp.ne.s32.totalorder %s149, %s165
      %p167 = scmp.eq.s32.totalorder %s26, 0
      %p168 = por %p166, %p167
      %p169 = scmp.le.s32.totalorder 1, %s20
      %p170 = scmp.lt.s32.totalorder %s20, 5
      %p171 = pnand %p169, %p170
      %p172 = pneg %p171
      // Predicated region
      $region9: #{tpu_custom_call.1} parent=5 // pred_check
        _
      $region10: #{tpu_custom_call.1} parent=5 // pred_check_branch
        %174 = sbr.rel (%p171) target = $region12
      $region11: #{tpu_custom_call.1} parent=5 // pred_region
        %s175 = ssub.s32 %s20, 1
        // Predicated region
        $region13: #{tpu_custom_call.1} parent=11 // pred_check
          %p176 = pneg %p133
        $region14: #{tpu_custom_call.1} parent=11 // pred_check_branch
          %178 = sbr.rel (%p176) target = $region16
        $region15: #{tpu_custom_call.1} parent=11 // pred_region
          %180 = vsyncadd [#allocation9], 0
          %s181 = sshll.u32 %s3, 4
          %s182 = int_to_ptr.hbm [resolvable:$true] %s181
          %s183 = sshll.u32 [#allocation8], 4
          %s184 = int_to_ptr.vmem [resolvable:$true] %s183
          %189 = dma.hbm_to_vmem [thread:$0]  %s182, 2048, %s184, [#allocation9], 128, 128, 8
        $region16: #{tpu_custom_call.1} parent=11 // pred_fallthru
          _
      $region12: #{tpu_custom_call.1} parent=5 // pred_fallthru
        _
      %p190 = scmp.lt.s32.totalorder %s20, 4
      // Predicated region
      $region17: #{tpu_custom_call.1} parent=5 // pred_check
        %p191 = pneg %p190
      $region18: #{tpu_custom_call.1} parent=5 // pred_check_branch
        %193 = sbr.rel (%p191) target = $region20
      $region19: #{tpu_custom_call.1} parent=5 // pred_region
        // Predicated region
        $region21: #{tpu_custom_call.1} parent=19 // pred_check
          %p194 = pneg %p52
        $region22: #{tpu_custom_call.1} parent=19 // pred_check_branch
          %196 = sbr.rel (%p194) target = $region24
        $region23: #{tpu_custom_call.1} parent=19 // pred_region
          %s197 = sand.u32 %s42, 1
          %s198 = scalar_lea.sflag [#allocation3], %s197
          %s199 = sand.u32 %s42, 1
          %s200 = scalar_lea.vmem [#allocation2], %s199
          %202 = vsyncadd %s198, 0
          %s203 = scalar_lea.hbm %s0, %s27
          %s205 = sshll.u32 %s203, 4
          %s206 = int_to_ptr.hbm [resolvable:$true] %s205
          %s207 = sshll.u32 %s200, 4
          %s208 = int_to_ptr.vmem [resolvable:$true] %s207
          %210 = dma.hbm_to_vmem [thread:$0]  %s206, 16, %s208, %s198
        $region24: #{tpu_custom_call.1} parent=19 // pred_fallthru
          _
        // Predicated region
        $region25: #{tpu_custom_call.1} parent=19 // pred_check
          %p211 = pneg %p78
        $region26: #{tpu_custom_call.1} parent=19 // pred_check_branch
          %213 = sbr.rel (%p211) target = $region28
        $region27: #{tpu_custom_call.1} parent=19 // pred_region
          %s214 = sand.u32 %s20, 1
          %s215 = scalar_lea.sflag [#allocation6], %s214
          %s216 = sand.u32 %s68, 1
          %s217 = scalar_lea.vmem [#allocation5], %s216
          %219 = vsyncadd %s215, 0
          %s220 = scalar_lea.hbm %s1, %s27
          %s222 = sshll.u32 %s220, 4
          %s223 = int_to_ptr.hbm [resolvable:$true] %s222
          %s224 = sshll.u32 %s217, 4
          %s225 = int_to_ptr.vmem [resolvable:$true] %s224
          %227 = dma.hbm_to_vmem [thread:$0]  %s223, 16, %s225, %s215
        $region28: #{tpu_custom_call.1} parent=19 // pred_fallthru
          _
        // Predicated region
        $region29: #{tpu_custom_call.1} parent=19 // pred_check
          %p228 = pneg %p106
        $region30: #{tpu_custom_call.1} parent=19 // pred_check_branch
          %230 = sbr.rel (%p228) target = $region32
        $region31: #{tpu_custom_call.1} parent=19 // pred_region
          %s231 = sand.u32 %s20, 1
          %s232 = scalar_lea.sflag [#allocation6], %s231
          %s233 = sand.u32 %s96, 1
          %s234 = smul.addr %s233, 32
          %s235 = scalar_lea.vmem [#allocation7], %s234
          %s236 = smul.u32 4, %s28
          %238 = vsyncadd %s232, 0
          %s239 = smul.addr %s27, 8
          %s240 = sadd.s32 %s236, %s239
          %s241 = smul.addr %s240, 8
          %s242 = scalar_lea.hbm %s2, %s241
          %s243 = sshll.u32 %s242, 4
          %s244 = int_to_ptr.hbm [resolvable:$true] %s243
          %s245 = sshll.u32 %s235, 4
          %s246 = int_to_ptr.vmem [resolvable:$true] %s245
          %251 = dma.hbm_to_vmem [thread:$0]  %s244, 512, %s246, %s232, 128, 128, 8
        $region32: #{tpu_custom_call.1} parent=19 // pred_fallthru
          _
      $region20: #{tpu_custom_call.1} parent=5 // pred_fallthru
        _
      %p252 = scmp.le.s32.totalorder 1, %s20
      %p253 = scmp.lt.s32.totalorder %s20, 5
      %p254 = pnand %p252, %p253
      %p255 = pneg %p254
      // Predicated region
      $region33: #{tpu_custom_call.1} parent=5 // pred_check
        _
      $region34: #{tpu_custom_call.1} parent=5 // pred_check_branch
        %257 = sbr.rel (%p254) target = $region36
      $region35: #{tpu_custom_call.1} parent=5 // pred_region
        %s258 = ssub.s32 %s20, 1
        %s259 = sand.u32 %s45, 1
        %s260 = scalar_lea.sflag [#allocation3], %s259
        %s261 = sand.u32 %s45, 1
        %s262 = scalar_lea.vmem [#allocation2], %s261
        // Predicated region
        $region37: #{tpu_custom_call.1} parent=35 // pred_check
          %p263 = pneg %p58
        $region38: #{tpu_custom_call.1} parent=35 // pred_check_branch
          %265 = sbr.rel (%p263) target = $region40
        $region39: #{tpu_custom_call.1} parent=35 // pred_region
          %267 = dma.done %s260, 16
        $region40: #{tpu_custom_call.1} parent=35 // pred_fallthru
          _
        %s268 = sand.u32 %s25, 1
        %s269 = scalar_lea.sflag [#allocation6], %s268
        %s270 = sand.u32 %s71, 1
        %s271 = scalar_lea.vmem [#allocation5], %s270
        // Predicated region
        $region41: #{tpu_custom_call.1} parent=35 // pred_check
          %p272 = pneg %p84
        $region42: #{tpu_custom_call.1} parent=35 // pred_check_branch
          %274 = sbr.rel (%p272) target = $region44
        $region43: #{tpu_custom_call.1} parent=35 // pred_region
          %276 = dma.done %s269, 16
        $region44: #{tpu_custom_call.1} parent=35 // pred_fallthru
          _
        %s277 = sand.u32 %s25, 1
        %s278 = scalar_lea.sflag [#allocation6], %s277
        %s279 = sand.u32 %s99, 1
        %s280 = smul.addr %s279, 32
        %s281 = scalar_lea.vmem [#allocation7], %s280
        // Predicated region
        $region45: #{tpu_custom_call.1} parent=35 // pred_check
          %p282 = pneg %p112
        $region46: #{tpu_custom_call.1} parent=35 // pred_check_branch
          %284 = sbr.rel (%p282) target = $region48
        $region47: #{tpu_custom_call.1} parent=35 // pred_region
          %286 = dma.done %s278, 512
        $region48: #{tpu_custom_call.1} parent=35 // pred_fallthru
          _
        // Predicated region
        $region49: #{tpu_custom_call.1} parent=35 // pred_check
          %p287 = pneg %p133
        $region50: #{tpu_custom_call.1} parent=35 // pred_check_branch
          %289 = sbr.rel (%p287) target = $region52
        $region51: #{tpu_custom_call.1} parent=35 // pred_region
          %291 = dma.done [#allocation9], 2048
        $region52: #{tpu_custom_call.1} parent=35 // pred_fallthru
          _
        %s292 = sand.u32 %s45, 1
        %s293 = scalar_lea.sflag [#allocation3], %s292
        %s294 = sand.u32 %s45, 1
        %s295 = scalar_lea.vmem [#allocation2], %s294
        %p296 = pneg %p58
        %p297 = pneg %p55
        %s298 = sand.u32 %s25, 1
        %s299 = scalar_lea.sflag [#allocation6], %s298
        %s300 = sand.u32 %s71, 1
        %s301 = scalar_lea.vmem [#allocation5], %s300
        %p302 = pneg %p84
        %p303 = pneg %p81
        %s304 = sand.u32 %s25, 1
        %s305 = scalar_lea.sflag [#allocation6], %s304
        %s306 = sand.u32 %s99, 1
        %s307 = smul.addr %s306, 32
        %s308 = scalar_lea.vmem [#allocation7], %s307
        %p309 = pneg %p112
        %p310 = pneg %p109
        %p311 = pneg %p133
        %p312 = pneg %p130
        %p313 = pneg %p161
        %p314 = pneg %p158
        %s315 = sand.u32 %s148, 1
        %s316 = scalar_lea.sflag [#allocation4], %s315
        %s317 = sand.u32 %s148, 1
        %s318 = smul.addr %s317, 32
        %s319 = scalar_lea.vmem [#allocation10], %s318
        %s320 = smul.u32 4, %s30
        %s321 = smul.u32 4, %s30
        %v322 = vld [vmem:[%s281] sm:$0xff]
        %v323 = vld [vmem:[%s281 + $0x8] sm:$0xff]
        %v324 = vld [vmem:[%s281 + $0x10] sm:$0xff]
        %v325 = vld [vmem:[%s281 + $0x18] sm:$0xff]
        %v326 = vld [vmem:[#allocation8] sm:$0xff]
        %v327 = vld [vmem:[#allocation8 + $0x8] sm:$0xff]
        %v328 = vld [vmem:[#allocation8 + $0x10] sm:$0xff]
        %v329 = vld [vmem:[#allocation8 + $0x18] sm:$0xff]
        %v330 = vld [vmem:[#allocation8 + $0x20] sm:$0xff]
        %v331 = vld [vmem:[#allocation8 + $0x28] sm:$0xff]
        %v332 = vld [vmem:[#allocation8 + $0x30] sm:$0xff]
        %v333 = vld [vmem:[#allocation8 + $0x38] sm:$0xff]
        %v334 = vld [vmem:[#allocation8 + $0x40] sm:$0xff]
        %v335 = vld [vmem:[#allocation8 + $0x48] sm:$0xff]
        %v336 = vld [vmem:[#allocation8 + $0x50] sm:$0xff]
        %v337 = vld [vmem:[#allocation8 + $0x58] sm:$0xff]
        %v338 = vld [vmem:[#allocation8 + $0x60] sm:$0xff]
        %v339 = vld [vmem:[#allocation8 + $0x68] sm:$0xff]
        %v340 = vld [vmem:[#allocation8 + $0x70] sm:$0xff]
        %v341 = vld [vmem:[#allocation8 + $0x78] sm:$0xff]
        %342 = vmatpush.msra.mxu0 %v341
        %343 = vmatpush.msra.mxu0 %v340
        %344 = vmatpush.msra.mxu0 %v339
        %345 = vmatpush.msra.mxu0 %v338
        %346 = vmatpush.msra.mxu0 %v337
        %347 = vmatpush.msra.mxu0 %v336
        %348 = vmatpush.msra.mxu0 %v335
        %349 = vmatpush.msra.mxu0 %v334
        %350 = vmatpush.msra.mxu0 %v333
        %351 = vmatpush.msra.mxu0 %v332
        %352 = vmatpush.msra.mxu0 %v331
        %353 = vmatpush.msra.mxu0 %v330
        %354 = vmatpush.msra.mxu0 %v329
        %355 = vmatpush.msra.mxu0 %v328
        %356 = vmatpush.msra.mxu0 %v327
        %357 = vmatpush.msra.mxu0 %v326
        %358 = vmatmul.f32.gmra.mxu0 %v322
        %v359 = vpop.f32.mrf.mxu0
        %v360 = vadd.f32 0.0, %v359
        %361 = vmatmul.f32.gmra.mxu0 %v323
        %v362 = vpop.f32.mrf.mxu0
        %v363 = vadd.f32 0.0, %v362
        %364 = vmatmul.f32.gmra.mxu0 %v324
        %v365 = vpop.f32.mrf.mxu0
        %v366 = vadd.f32 0.0, %v365
        %367 = vmatmul.f32.gmra.mxu0 %v325
        %v368 = vpop.f32.mrf.mxu0
        %v369 = vadd.f32 0.0, %v368
        %370 = vdwg.mxu0
        %v371 = vld [vmem:[%s262] sm:$0x1]
        %v373 = vperm.slane %v371, 0
        %v375 = vmul.f32 %v360, %v373
        %v376 = vmul.f32 %v363, %v373
        %v377 = vmul.f32 %v366, %v373
        %v378 = vmul.f32 %v369, %v373
        %v379 = vld [vmem:[%s271] sm:$0x1]
        %v381 = vperm.slane %v379, 0
        %v383 = vadd.f32 %v375, %v381
        %v384 = vadd.f32 %v376, %v381
        %v385 = vadd.f32 %v377, %v381
        %v386 = vadd.f32 %v378, %v381
        %387 = vst [vmem:[%s319] sm:$0xff] %v383
        %388 = vst [vmem:[%s319 + $0x8] sm:$0xff] %v384
        %389 = vst [vmem:[%s319 + $0x10] sm:$0xff] %v385
        %390 = vst [vmem:[%s319 + $0x18] sm:$0xff] %v386
        %s391 = sand.u32 %s148, 1
        %s392 = scalar_lea.sflag [#allocation4], %s391
        %s393 = sand.u32 %s148, 1
        %s394 = smul.addr %s393, 32
        %s395 = scalar_lea.vmem [#allocation10], %s394
        // Predicated region
        $region53: #{tpu_custom_call.1} parent=35 // pred_check
          %p396 = pneg %p158
        $region54: #{tpu_custom_call.1} parent=35 // pred_check_branch
          %398 = sbr.rel (%p396) target = $region56
        $region55: #{tpu_custom_call.1} parent=35 // pred_region
          %s399 = smul.u32 4, %s30
          %401 = vsyncadd %s392, 0
          %s402 = smul.addr %s29, 8
          %s403 = sadd.s32 %s399, %s402
          %s404 = smul.addr %s403, 8
          %s405 = scalar_lea.hbm %s4, %s404
          %s406 = sshll.u32 %s395, 4
          %s407 = int_to_ptr.vmem [resolvable:$true] %s406
          %s408 = sshll.u32 %s405, 4
          %s409 = int_to_ptr.hbm [resolvable:$true] %s408
          %414 = dma.vmem_to_hbm [thread:$0]  %s407, 512, %s409, %s392, 128, 128, 8
        $region56: #{tpu_custom_call.1} parent=35 // pred_fallthru
          _
      $region36: #{tpu_custom_call.1} parent=5 // pred_fallthru
        _
      %p415 = scmp.le.s32.totalorder 2, %s20
      // Predicated region
      $region57: #{tpu_custom_call.1} parent=5 // pred_check
        %p416 = pneg %p415
      $region58: #{tpu_custom_call.1} parent=5 // pred_check_branch
        %418 = sbr.rel (%p416) target = $region60
      $region59: #{tpu_custom_call.1} parent=5 // pred_region
        %s419 = ssub.s32 %s20, 2
        // Predicated region
        $region61: #{tpu_custom_call.1} parent=59 // pred_check
          %p420 = pneg %p164
        $region62: #{tpu_custom_call.1} parent=59 // pred_check_branch
          %422 = sbr.rel (%p420) target = $region64
        $region63: #{tpu_custom_call.1} parent=59 // pred_region
          %s423 = sand.u32 %s149, 1
          %s424 = scalar_lea.sflag [#allocation4], %s423
          %s425 = sand.u32 %s149, 1
          %s426 = smul.addr %s425, 32
          %s427 = scalar_lea.vmem [#allocation10], %s426
          %429 = dma.done %s424, 512
        $region64: #{tpu_custom_call.1} parent=59 // pred_fallthru
          _
      $region60: #{tpu_custom_call.1} parent=5 // pred_fallthru
        _
    $region6: #{tpu_custom_call.1} parent=1 // loop_footer
      %s24 = sadd.s32 1, %s20
    $region7: #{tpu_custom_call.1} parent=1 // loop_footer_branch
      %19 = sbr.rel target = $region3
    $region8: #{tpu_custom_call.1} parent=1 // loop_exit
      _
    %430 = vsyncpa [#allocation3], 1
    %s431 = scalar_lea.sflag [#allocation3], 1
    %432 = vsyncpa %s431, 1
    %433 = vsyncpa [#allocation6], 1
    %s434 = scalar_lea.sflag [#allocation6], 1
    %435 = vsyncpa %s434, 1
    %436 = vsyncpa [#allocation9], 1
    %437 = vsyncpa [#allocation4], 1
    %s438 = scalar_lea.sflag [#allocation4], 1
    %439 = vsyncpa %s438, 1

</llo_original>
